<compile_context>
chip_gen: v6e
topology: v6e:2x2x1
jax: 0.10.0
libtpu: 0.0.40
codegen_flags: <defaults>
</compile_context>

<pallas_src>
import jax
import jax.numpy as jnp
from jax.experimental import pallas as pl
from jax.experimental.pallas import tpu as pltpu


def _make_layernorm_kernel(eps):
    def layernorm_kernel(x_ref, g_ref, b_ref, o_ref):
        # x block: (Bb, C, Tt) -- C on sublanes, Tt on lanes; reduce over C.
        x = x_ref[...].astype(jnp.float32)
        mean = jnp.mean(x, axis=1, keepdims=True)             # (Bb, 1, Tt)
        xm = x - mean
        var = jnp.mean(xm * xm, axis=1, keepdims=True)        # biased (unbiased=False)
        # Exact divide: kernel is HBM-bound, VPU slack makes this free, and it
        # keeps the result within f32 rounding of the reference (the approx
        # reciprocal previously blew the 1e-5 tolerance).
        inv = 1.0 / (jnp.sqrt(var) + eps)                     # (std + eps) semantics
        g = g_ref[...].astype(jnp.float32)                    # (1, C, 1)
        b = b_ref[...].astype(jnp.float32)                    # (1, C, 1)
        o_ref[...] = (xm * inv * g + b).astype(o_ref.dtype)

    return layernorm_kernel


def _pick_tiles(B, C, Tp, itemsize, *, vmem_budget=24 << 20,
                min_payload=1 << 20, min_steps=8):
    """Choose (b_tile, t_tile) for blocks of shape (b_tile, C, t_tile).

    Goals (in priority order):
      1. >= min_steps grid steps (v7x: >=4 steps per TensorCore so the
         BlockSpec double-buffer actually overlaps DMA with compute).
      2. >= min_payload of in+out HBM traffic per step (amortize the ~0.35us
         fixed per-step overhead, important when C is small).
      3. Larger payload (capped) / larger lane-dense t_tile as tie-breakers.
    VMEM accounting includes the double-buffered in+out blocks at the input
    dtype PLUS ~3x block of in-kernel f32 temporaries (x upcast, x-mean,
    output temp), so the pick stays safe on v7x's 32 MiB scoped default.
    """
    t_cands = [t for t in (2048, 1024, 512, 256, 128) if t <= Tp and Tp % t == 0]
    if not t_cands:  # Tp is always a multiple of 128 after padding; keep a guard.
        t_cands = [Tp]
    b_cands = [bb for bb in range(1, B + 1) if B % bb == 0]

    best, best_key = None, None
    for tt in t_cands:
        for bb in b_cands:
            blk = bb * C * tt
            vmem_need = 4 * blk * itemsize + 3 * blk * 4
            if vmem_need > vmem_budget:
                continue
            payload = 2 * blk * itemsize                   # in + out bytes per step
            steps = (B // bb) * (Tp // tt)
            key = (steps >= min_steps,
                   payload >= min_payload,
                   min(payload, 4 * min_payload),          # cap: keep steps for pipelining
                   tt)
            if best_key is None or key > best_key:
                best, best_key = (bb, tt), key
    if best is None:
        # Pathologically huge C: fall back to the smallest lane-dense block.
        best = (1, t_cands[-1])
    return best


def layer_norm(x, g, b, *, eps=1e-5):
    """Channel LayerNorm matching MGFN LayerNorm.forward.

    x: (B, C, T); g, b: (1, C, 1).
    y = (x - mean) / (sqrt(var_biased) + eps) * g + b, reduced over axis=1.
    """
    B, C, T = x.shape
    itemsize = jnp.dtype(x.dtype).itemsize

    # Pad T to a multiple of 128: output stores stay unmasked (lane-dense) and
    # VMEM stays bounded for arbitrary T. Normalization is over C, so padded
    # T columns are independent and simply sliced off afterwards.
    Tp = ((T + 127) // 128) * 128
    xp = x if Tp == T else jnp.pad(x, ((0, 0), (0, 0), (0, Tp - T)))

    b_tile, t_tile = _pick_tiles(B, C, Tp, itemsize)
    grid = (B // b_tile, Tp // t_tile)

    blk = b_tile * C * t_tile
    # Double-buffered in+out blocks + f32 in-kernel temporaries + g/b + slack.
    vmem_need = 4 * blk * itemsize + 3 * blk * 4 + 4 * C * 4 + (1 << 20)
    vmem_limit = int(min(max(32 << 20, vmem_need), 48 << 20))

    cost = pl.CostEstimate(
        flops=int(7 * B * C * Tp),
        transcendentals=int(B * Tp),
        bytes_accessed=int(2 * B * C * Tp * itemsize + 2 * C * 4),
    )

    out = pl.pallas_call(
        _make_layernorm_kernel(eps),
        out_shape=jax.ShapeDtypeStruct((B, C, Tp), x.dtype),
        grid_spec=pltpu.PrefetchScalarGridSpec(
            num_scalar_prefetch=0,
            grid=grid,
            in_specs=[
                pl.BlockSpec((b_tile, C, t_tile), lambda bi, ti: (bi, 0, ti)),
                # g/b are tiny, loop-invariant blocks in the natural
                # sublane (channel) layout for the per-channel affine.
                pl.BlockSpec((1, C, 1), lambda bi, ti: (0, 0, 0)),
                pl.BlockSpec((1, C, 1), lambda bi, ti: (0, 0, 0)),
            ],
            out_specs=pl.BlockSpec((b_tile, C, t_tile), lambda bi, ti: (bi, 0, ti)),
        ),
        compiler_params=pltpu.CompilerParams(
            dimension_semantics=("parallel", "parallel"),
            vmem_limit_bytes=vmem_limit,
        ),
        cost_estimate=cost,
    )(xp, g, b)

    return out if Tp == T else out[:, :, :T]


def layer_norm_ref(x, g, b, eps=1e-5):
    xf = x.astype(jnp.float32)
    mean = jnp.mean(xf, axis=1, keepdims=True)
    std = jnp.sqrt(jnp.var(xf, axis=1, keepdims=True))  # biased (ddof=0)
    return ((xf - mean) / (std + eps) * g + b).astype(x.dtype)


if __name__ == "__main__":
    key = jax.random.PRNGKey(0)
    kx, kg, kb = jax.random.split(key, 3)

    B, C, T = 2, 32, 512
    x = jax.random.normal(kx, (B, C, T), dtype=jnp.float32)
    # Random affine params (deterministic) to actually exercise g/b paths.
    g = 1.0 + 0.1 * jax.random.normal(kg, (1, C, 1), dtype=jnp.float32)
    b = 0.1 * jax.random.normal(kb, (1, C, 1), dtype=jnp.float32)

    out = layer_norm(x, g, b, eps=1e-5)
    out = jax.block_until_ready(out)
    ref = layer_norm_ref(x, g, b, eps=1e-5)
    assert out.shape == (B, C, T)
    assert jnp.allclose(out, ref, atol=1e-5, rtol=1e-5), float(
        jnp.max(jnp.abs(out - ref))
    )

    # Also exercise the non-multiple-of-128 T path (wrapper padding).
    T2 = 200
    x2 = jax.random.normal(kx, (B, C, T2), dtype=jnp.float32)
    out2 = jax.block_until_ready(layer_norm(x2, g, b, eps=1e-5))
    ref2 = layer_norm_ref(x2, g, b, eps=1e-5)
    assert out2.shape == (B, C, T2)
    assert jnp.allclose(out2, ref2, atol=1e-5, rtol=1e-5), float(
        jnp.max(jnp.abs(out2 - ref2))
    )

    print("KERNEL_OK")
</pallas_src>

<mosaic_0001>
module attributes {stable_mosaic.version = 11 : i64} {
  func.func @layernorm_kernel(%arg0: i32, %arg1: i32, %arg2: memref<1x32x128xf32, #tpu.memory_space<vmem>>, %arg3: memref<1x32x1xf32, #tpu.memory_space<vmem>>, %arg4: memref<1x32x1xf32, #tpu.memory_space<vmem>>, %arg5: memref<1x32x128xf32, #tpu.memory_space<vmem>>) attributes {dimension_semantics = [#tpu.dimension_semantics<parallel>, #tpu.dimension_semantics<parallel>], iteration_bounds = array<i64: 2, 4>, scalar_prefetch = 0 : i64, scratch_operands = 0 : i64, tpu.core_type = #tpu.core_type<tc>, window_params = [{transform_indices = @transform_0, window_bounds = array<i64: 1, 32, 128>}, {pipeline_mode = #tpu.pipeline_mode<synchronous>, transform_indices = @transform_1, window_bounds = array<i64: 1, 32, 1>}, {pipeline_mode = #tpu.pipeline_mode<synchronous>, transform_indices = @transform_2, window_bounds = array<i64: 1, 32, 1>}, {transform_indices = @transform_3, window_bounds = array<i64: 1, 32, 128>}]} {
    %c0 = arith.constant 0 : index
    %c0_0 = arith.constant 0 : index
    %c0_1 = arith.constant 0 : index
    %0 = vector.load %arg2[%c0, %c0_0, %c0_1] : memref<1x32x128xf32, #tpu.memory_space<vmem>>, vector<1x32x128xf32>
    %cst = arith.constant dense<0.000000e+00> : vector<1x128xf32>
    %1 = vector.multi_reduction <add>, %0, %cst [1] : vector<1x32x128xf32> to vector<1x128xf32>
    %2 = vector.shape_cast %1 : vector<1x128xf32> to vector<1x1x128xf32>
    %cst_2 = arith.constant 3.200000e+01 : f32
    %3 = vector.broadcast %cst_2 : f32 to vector<1x1x128xf32>
    %4 = arith.divf %2, %3 : vector<1x1x128xf32>
    %5 = vector.broadcast %4 : vector<1x1x128xf32> to vector<1x32x128xf32>
    %6 = arith.subf %0, %5 : vector<1x32x128xf32>
    %7 = arith.mulf %6, %6 : vector<1x32x128xf32>
    %cst_3 = arith.constant dense<0.000000e+00> : vector<1x128xf32>
    %8 = vector.multi_reduction <add>, %7, %cst_3 [1] : vector<1x32x128xf32> to vector<1x128xf32>
    %9 = vector.shape_cast %8 : vector<1x128xf32> to vector<1x1x128xf32>
    %cst_4 = arith.constant 3.200000e+01 : f32
    %10 = vector.broadcast %cst_4 : f32 to vector<1x1x128xf32>
    %11 = arith.divf %9, %10 : vector<1x1x128xf32>
    %12 = math.sqrt %11 : vector<1x1x128xf32>
    %cst_5 = arith.constant 9.99999974E-6 : f32
    %13 = vector.broadcast %cst_5 : f32 to vector<1x1x128xf32>
    %14 = arith.addf %12, %13 : vector<1x1x128xf32>
    %cst_6 = arith.constant 1.000000e+00 : f32
    %15 = vector.broadcast %cst_6 : f32 to vector<1x1x128xf32>
    %16 = arith.divf %15, %14 : vector<1x1x128xf32>
    %c0_7 = arith.constant 0 : index
    %c0_8 = arith.constant 0 : index
    %c0_9 = arith.constant 0 : index
    %17 = vector.load %arg3[%c0_7, %c0_8, %c0_9] : memref<1x32x1xf32, #tpu.memory_space<vmem>>, vector<1x32x1xf32>
    %c0_10 = arith.constant 0 : index
    %c0_11 = arith.constant 0 : index
    %c0_12 = arith.constant 0 : index
    %18 = vector.load %arg4[%c0_10, %c0_11, %c0_12] : memref<1x32x1xf32, #tpu.memory_space<vmem>>, vector<1x32x1xf32>
    %19 = vector.broadcast %16 : vector<1x1x128xf32> to vector<1x32x128xf32>
    %20 = arith.mulf %6, %19 : vector<1x32x128xf32>
    %21 = vector.broadcast %17 : vector<1x32x1xf32> to vector<1x32x128xf32>
    %22 = arith.mulf %20, %21 : vector<1x32x128xf32>
    %23 = vector.broadcast %18 : vector<1x32x1xf32> to vector<1x32x128xf32>
    %24 = arith.addf %22, %23 : vector<1x32x128xf32>
    %c0_13 = arith.constant 0 : index
    %c0_14 = arith.constant 0 : index
    %c0_15 = arith.constant 0 : index
    %25 = vector.load %arg5[%c0_13, %c0_14, %c0_15] : memref<1x32x128xf32, #tpu.memory_space<vmem>>, vector<1x32x128xf32>
    tpu.vector_store %arg5[%c0_13, %c0_14, %c0_15], %24 {strides = array<i32>} : memref<1x32x128xf32, #tpu.memory_space<vmem>>, vector<1x32x128xf32>,
    return
  }
  func.func @transform_0(%arg0: i32, %arg1: i32) -> (i32, i32, i32) {
    %c0_i32 = arith.constant 0 : i32
    %c0_i32_0 = arith.constant 0 : i32
    return %arg0, %c0_i32, %arg1 : i32, i32, i32
  }
  func.func @transform_1(%arg0: i32, %arg1: i32) -> (i32, i32, i32) {
    %c0_i32 = arith.constant 0 : i32
    %c0_i32_0 = arith.constant 0 : i32
    %c0_i32_1 = arith.constant 0 : i32
    %c0_i32_2 = arith.constant 0 : i32
    return %c0_i32, %c0_i32_0, %c0_i32_1 : i32, i32, i32
  }
  func.func @transform_2(%arg0: i32, %arg1: i32) -> (i32, i32, i32) {
    %c0_i32 = arith.constant 0 : i32
    %c0_i32_0 = arith.constant 0 : i32
    %c0_i32_1 = arith.constant 0 : i32
    %c0_i32_2 = arith.constant 0 : i32
    return %c0_i32, %c0_i32_0, %c0_i32_1 : i32, i32, i32
  }
  func.func @transform_3(%arg0: i32, %arg1: i32) -> (i32, i32, i32) {
    %c0_i32 = arith.constant 0 : i32
    %c0_i32_0 = arith.constant 0 : i32
    return %arg0, %c0_i32, %arg1 : i32, i32, i32
  }
}

</mosaic_0001>

<llo_original>
// kernel: tpu_custom_call.1
$region0: #{tpu_custom_call.1}
  #allocation0 [shape = 'u32[]', space=smem, size = 0x4, offset = 0x4, fixed_abs, tag = 'smem constant byte address 0x4 - core index']
  #allocation1 [shape = 'u32[144,128]{1,0:T(1,128)}', space=vmem, size = 0x12000, scoped, tag = 'internal scratch']
  %s0 = inlined_call_operand.hbm [shape: f32[2,32,512], index: 0, kind: input, shape index: {}]
  %s1 = inlined_call_operand.vmem [shape: f32[1,32,1], index: 1, kind: input, shape index: {}]
  %s2 = inlined_call_operand.vmem [shape: f32[1,32,1], index: 2, kind: input, shape index: {}]
  %s3 = inlined_call_operand.hbm [shape: f32[2,32,512], index: 3, kind: output, shape index: {}]
  %s4 = sld [smem:[#allocation0]]
  $region49: #{tpu_custom_call.1} parent=0
    _
  %s6 = ssub.s32 1, %s4
  %s7 = scalar_select 0, %s6, %s4
  $region1: #{tpu_custom_call.1} parent=0
    #allocation2 [shape = 'u8[32768]{0}', space=vmem, size = 0x8000, scoped, tag = 'input window, operand 0']
    #allocation3 [shape = 's32[2]{0}', space=sflag, size = 0x8, scoped, tag = 'scoped memory for tpu_custom_call.1']
    #allocation4 [shape = 's32[2]{0}', space=sflag, size = 0x8, scoped, tag = 'scoped memory for tpu_custom_call.1']
    #allocation5 [shape = 'u8[32768]{0}', space=vmem, size = 0x8000, scoped, tag = 'output window, operand 0']
    %8 = vsyncpa [#allocation3], 0
    %s9 = scalar_lea.sflag [#allocation3], 1
    %10 = vsyncpa %s9, 0
    %11 = vsyncpa [#allocation4], 0
    %s12 = scalar_lea.sflag [#allocation4], 1
    %13 = vsyncpa %s12, 0
    loop: start=0, step=1, limit=10
    $region2: #{tpu_custom_call.1} parent=1 // loop_pre_header
      _
    $region3: #{tpu_custom_call.1} parent=1 // loop_header
      %s15 = sphi 0, %s19
      %p16 = scmp.ge.s32.totalorder %s15, 10
      %s22 = sphi 0, %s34
      %s23 = sphi 0, %s30
      %s24 = sphi 0, %s22
      %s25 = sphi 0, %s23
      %s26 = sphi 0, %s24
      %s27 = sphi 0, %s25
      %s39 = sphi 0, %s41
      %s42 = sphi 0, %s39
      %s43 = sphi 0, %s42
      %s59 = sphi 0, %s43
      %s63 = sphi 0, %s63
      %s65 = sphi 0, %s63
      %s66 = sphi 0, %s65
      %s80 = sphi 0, %s66
      %s84 = sphi 0, %s84
      %s86 = sphi 0, %s84
      %s87 = sphi 0, %s86
      %s101 = sphi 0, %s87
      %s109 = sphi 0, %s111
      %s112 = sphi 0, %s109
      %s113 = sphi 0, %s112
      %s129 = sphi 0, %s113
    $region4: #{tpu_custom_call.1} parent=1 // loop_header_branch
      %18 = sbr.rel (%p16) target = $region8
    $region5: #{tpu_custom_call.1} parent=1 // loop_body
      %s20 = ssub.s32 %s15, 1
      %s21 = ssub.s32 %s15, 2
      %s28 = sadd.s32 1, %s23
      %p29 = scmp.ge.s32.totalorder %s28, 4
      %s30 = scalar_select %p29, 0, %s28
      %s31 = sadd.s32 1, %s22
      %s32 = scalar_select %p29, %s31, %s22
      %p33 = scmp.ge.s32.totalorder %s32, 2
      %s34 = scalar_select %p33, 0, %s32
      %s35 = ssub.s32 %s22, %s34
      %s36 = ssub.s32 %s23, %s30
      %s37 = sor.u32 %s35, %s36
      %p38 = scmp.eq.s32.totalorder %s37, 0
      %s40 = sadd.s32 %s39, 1
      %s41 = scalar_select %p38, %s39, %s40
      %p44 = pneg %p38
      %p45 = scmp.eq.s32.totalorder %s15, 7
      %p46 = por %p44, %p45
      %p47 = scmp.ne.s32.totalorder %s39, %s42
      %p48 = scmp.eq.s32.totalorder %s15, 0
      %p49 = por %p47, %p48
      %p50 = scmp.ne.s32.totalorder %s39, %s42
      %p51 = scmp.eq.s32.totalorder %s20, 7
      %p52 = por %p50, %p51
      %p53 = scmp.ne.s32.totalorder %s42, %s43
      %p54 = scmp.eq.s32.totalorder %s20, 0
      %p55 = por %p53, %p54
      %p56 = scmp.ne.s32.totalorder %s42, %s43
      %p57 = scmp.eq.s32.totalorder %s21, 7
      %p58 = por %p56, %p57
      %p60 = scmp.ne.s32.totalorder %s43, %s59
      %p61 = scmp.eq.s32.totalorder %s21, 0
      %p62 = por %p60, %p61
      %s64 = sadd.s32 %s63, 1
      %p67 = scmp.eq.s32.totalorder %s15, 7
      %p68 = scmp.ne.s32.totalorder %s63, %s65
      %p69 = scmp.eq.s32.totalorder %s15, 0
      %p70 = por %p68, %p69
      %p71 = scmp.ne.s32.totalorder %s63, %s65
      %p72 = scmp.eq.s32.totalorder %s20, 7
      %p73 = por %p71, %p72
      %p74 = scmp.ne.s32.totalorder %s65, %s66
      %p75 = scmp.eq.s32.totalorder %s20, 0
      %p76 = por %p74, %p75
      %p77 = scmp.ne.s32.totalorder %s65, %s66
      %p78 = scmp.eq.s32.totalorder %s21, 7
      %p79 = por %p77, %p78
      %p81 = scmp.ne.s32.totalorder %s66, %s80
      %p82 = scmp.eq.s32.totalorder %s21, 0
      %p83 = por %p81, %p82
      %s85 = sadd.s32 %s84, 1
      %p88 = scmp.eq.s32.totalorder %s15, 7
      %p89 = scmp.ne.s32.totalorder %s84, %s86
      %p90 = scmp.eq.s32.totalorder %s15, 0
      %p91 = por %p89, %p90
      %p92 = scmp.ne.s32.totalorder %s84, %s86
      %p93 = scmp.eq.s32.totalorder %s20, 7
      %p94 = por %p92, %p93
      %p95 = scmp.ne.s32.totalorder %s86, %s87
      %p96 = scmp.eq.s32.totalorder %s20, 0
      %p97 = por %p95, %p96
      %p98 = scmp.ne.s32.totalorder %s86, %s87
      %p99 = scmp.eq.s32.totalorder %s21, 7
      %p100 = por %p98, %p99
      %p102 = scmp.ne.s32.totalorder %s87, %s101
      %p103 = scmp.eq.s32.totalorder %s21, 0
      %p104 = por %p102, %p103
      %s105 = ssub.s32 %s22, %s34
      %s106 = ssub.s32 %s23, %s30
      %s107 = sor.u32 %s105, %s106
      %p108 = scmp.eq.s32.totalorder %s107, 0
      %s110 = sadd.s32 %s109, 1
      %s111 = scalar_select %p108, %s109, %s110
      %p114 = pneg %p108
      %p115 = scmp.eq.s32.totalorder %s15, 7
      %p116 = por %p114, %p115
      %p117 = scmp.ne.s32.totalorder %s109, %s112
      %p118 = scmp.eq.s32.totalorder %s15, 0
      %p119 = por %p117, %p118
      %p120 = scmp.ne.s32.totalorder %s109, %s112
      %p121 = scmp.eq.s32.totalorder %s20, 7
      %p122 = por %p120, %p121
      %p123 = scmp.ne.s32.totalorder %s112, %s113
      %p124 = scmp.eq.s32.totalorder %s20, 0
      %p125 = por %p123, %p124
      %p126 = scmp.ne.s32.totalorder %s112, %s113
      %p127 = scmp.eq.s32.totalorder %s21, 7
      %p128 = por %p126, %p127
      %p130 = scmp.ne.s32.totalorder %s113, %s129
      %p131 = scmp.eq.s32.totalorder %s21, 0
      %p132 = por %p130, %p131
      %p133 = scmp.le.s32.totalorder 1, %s15
      %p134 = scmp.lt.s32.totalorder %s15, 9
      %p135 = pnand %p133, %p134
      %p136 = pneg %p135
      // Predicated region
      $region9: #{tpu_custom_call.1} parent=5 // pred_check
        _
      $region10: #{tpu_custom_call.1} parent=5 // pred_check_branch
        %138 = sbr.rel (%p135) target = $region12
      $region11: #{tpu_custom_call.1} parent=5 // pred_region
        %s139 = ssub.s32 %s15, 1
        // Predicated region
        $region13: #{tpu_custom_call.1} parent=11 // pred_check
          %p140 = pneg %p76
        $region14: #{tpu_custom_call.1} parent=11 // pred_check_branch
          %142 = sbr.rel (%p140) target = $region16
        $region15: #{tpu_custom_call.1} parent=11 // pred_region
          _
        $region16: #{tpu_custom_call.1} parent=11 // pred_fallthru
          _
        // Predicated region
        $region17: #{tpu_custom_call.1} parent=11 // pred_check
          %p143 = pneg %p97
        $region18: #{tpu_custom_call.1} parent=11 // pred_check_branch
          %145 = sbr.rel (%p143) target = $region20
        $region19: #{tpu_custom_call.1} parent=11 // pred_region
          _
        $region20: #{tpu_custom_call.1} parent=11 // pred_fallthru
          _
      $region12: #{tpu_custom_call.1} parent=5 // pred_fallthru
        _
      %p146 = scmp.lt.s32.totalorder %s15, 8
      // Predicated region
      $region21: #{tpu_custom_call.1} parent=5 // pred_check
        %p147 = pneg %p146
      $region22: #{tpu_custom_call.1} parent=5 // pred_check_branch
        %149 = sbr.rel (%p147) target = $region24
      $region23: #{tpu_custom_call.1} parent=5 // pred_region
        // Predicated region
        $region25: #{tpu_custom_call.1} parent=23 // pred_check
          %p150 = pneg %p49
        $region26: #{tpu_custom_call.1} parent=23 // pred_check_branch
          %152 = sbr.rel (%p150) target = $region28
        $region27: #{tpu_custom_call.1} parent=23 // pred_region
          %s153 = sand.u32 %s39, 1
          %s154 = scalar_lea.sflag [#allocation3], %s153
          %s155 = sand.u32 %s39, 1
          %s156 = smul.addr %s155, 32
          %s157 = scalar_lea.vmem [#allocation2], %s156
          %s159 = ssub.s32 512, 512
          %160 = vsyncadd %s154, %s159
          %s161 = smul.addr %s22, 16
          %s162 = sadd.s32 %s23, %s161
          %s163 = smul.addr %s162, 128
          %s164 = scalar_lea.hbm %s0, %s163
          %s165 = sshll.u32 %s157, 4
          %s166 = int_to_ptr.vmem [resolvable:$true] %s165
          %171 = dma.hbm_to_vmem [thread:$0]  %s164, 512, %s166, %s154, 512, 128, 8
        $region28: #{tpu_custom_call.1} parent=23 // pred_fallthru
          _
      $region24: #{tpu_custom_call.1} parent=5 // pred_fallthru
        _
      %p172 = scmp.le.s32.totalorder 1, %s15
      %p173 = scmp.lt.s32.totalorder %s15, 9
      %p174 = pnand %p172, %p173
      %p175 = pneg %p174
      // Predicated region
      $region29: #{tpu_custom_call.1} parent=5 // pred_check
        _
      $region30: #{tpu_custom_call.1} parent=5 // pred_check_branch
        %177 = sbr.rel (%p174) target = $region32
      $region31: #{tpu_custom_call.1} parent=5 // pred_region
        %s178 = ssub.s32 %s15, 1
        %s179 = sand.u32 %s42, 1
        %s180 = scalar_lea.sflag [#allocation3], %s179
        %s181 = sand.u32 %s42, 1
        %s182 = smul.addr %s181, 32
        %s183 = scalar_lea.vmem [#allocation2], %s182
        // Predicated region
        $region33: #{tpu_custom_call.1} parent=31 // pred_check
          %p184 = pneg %p55
        $region34: #{tpu_custom_call.1} parent=31 // pred_check_branch
          %186 = sbr.rel (%p184) target = $region36
        $region35: #{tpu_custom_call.1} parent=31 // pred_region
          %187 = dma.done %s180, 512
        $region36: #{tpu_custom_call.1} parent=31 // pred_fallthru
          _
        %s188 = sand.u32 %s42, 1
        %s189 = scalar_lea.sflag [#allocation3], %s188
        %s190 = sand.u32 %s42, 1
        %s191 = smul.addr %s190, 32
        %s192 = scalar_lea.vmem [#allocation2], %s191
        %p193 = pneg %p55
        %p194 = pneg %p52
        %p195 = pneg %p76
        %p196 = pneg %p73
        %p197 = pneg %p97
        %p198 = pneg %p94
        %p199 = pneg %p125
        %p200 = pneg %p122
        %s201 = sand.u32 %s112, 1
        %s202 = scalar_lea.sflag [#allocation4], %s201
        %s203 = sand.u32 %s112, 1
        %s204 = smul.addr %s203, 32
        %s205 = scalar_lea.vmem [#allocation5], %s204
        %v206 = vld [vmem:[%s183] sm:$0xff]
        %v207 = vld [vmem:[%s183 + $0x8] sm:$0xff]
        %v208 = vld [vmem:[%s183 + $0x10] sm:$0xff]
        %v209 = vld [vmem:[%s183 + $0x18] sm:$0xff]
        %v210 = vadd.f32 %v206, %v207
        %v211 = vadd.f32 %v210, %v208
        %v212 = vadd.f32 %v211, %v209
        %v213 = vrot.slane %v212, 4
        %v214 = vadd.f32 %v212, %v213
        %v215 = vrot.slane %v214, 2
        %v216 = vadd.f32 %v214, %v215
        %v217 = vrot.slane %v216, 1
        %v218 = vadd.f32 %v216, %v217
        %v219 = vrcp.pop 32.0
        %v220 = vmul.f32 %v218, %v219
        %v221 = vsub.f32 %v206, %v220
        %v222 = vsub.f32 %v207, %v220
        %v223 = vsub.f32 %v208, %v220
        %v224 = vsub.f32 %v209, %v220
        %v225 = vmul.f32 %v221, %v221
        %v226 = vmul.f32 %v222, %v222
        %v227 = vmul.f32 %v223, %v223
        %v228 = vmul.f32 %v224, %v224
        %v229 = vadd.f32 %v225, %v226
        %v230 = vadd.f32 %v229, %v227
        %v231 = vadd.f32 %v230, %v228
        %v232 = vrot.slane %v231, 4
        %v233 = vadd.f32 %v231, %v232
        %v234 = vrot.slane %v233, 2
        %v235 = vadd.f32 %v233, %v234
        %v236 = vrot.slane %v235, 1
        %v237 = vadd.f32 %v235, %v236
        %v238 = vmul.f32 %v237, %v219
        %v239 = vrsqrt.pop %v238
        %v240 = vmul.f32 %v238, %v239
        %vm241 = vcmp.eq.f32.partialorder %v238, inf
        %v242 = vsel %vm241, %v238, %v240
        %vm243 = vcmp.eq.f32.partialorder %v238, 0.0
        %v244 = vand.u32 %v238, 2147483648
        %v245 = vsel %vm243, %v244, %v242
        %v246 = vadd.f32 %v245, 1e-05
        %v247 = vrcp.pop %v246
        %v248 = vmul.f32 1.0, %v247
        %v249 = vld [vmem:[%s1] sm:$0xff]
        %v250 = vld [vmem:[%s1 + $0x8] sm:$0xff]
        %v251 = vld [vmem:[%s1 + $0x10] sm:$0xff]
        %v252 = vld [vmem:[%s1 + $0x18] sm:$0xff]
        %v253 = vld [vmem:[%s2] sm:$0xff]
        %v254 = vld [vmem:[%s2 + $0x8] sm:$0xff]
        %v255 = vld [vmem:[%s2 + $0x10] sm:$0xff]
        %v256 = vld [vmem:[%s2 + $0x18] sm:$0xff]
        %v257 = vmul.f32 %v221, %v248
        %v258 = vmul.f32 %v222, %v248
        %v259 = vmul.f32 %v223, %v248
        %v260 = vmul.f32 %v224, %v248
        %262 = vset.pattern.permute.xlu0 0
        %263 = vperm.xlu0 %262, %v249
        %v264 = vpop.permute.xlu0 %263
        %267 = vset.pattern.permute.xlu0 0
        %268 = vperm.xlu0 %267, %v250
        %v269 = vpop.permute.xlu0 %268
        %272 = vset.pattern.permute.xlu0 0
        %273 = vperm.xlu0 %272, %v251
        %v274 = vpop.permute.xlu0 %273
        %277 = vset.pattern.permute.xlu0 0
        %278 = vperm.xlu0 %277, %v252
        %v279 = vpop.permute.xlu0 %278
        %v281 = vmul.f32 %v257, %v264
        %v282 = vmul.f32 %v258, %v269
        %v283 = vmul.f32 %v259, %v274
        %v284 = vmul.f32 %v260, %v279
        %286 = vset.pattern.permute.xlu0 0
        %287 = vperm.xlu0 %286, %v253
        %v288 = vpop.permute.xlu0 %287
        %291 = vset.pattern.permute.xlu0 0
        %292 = vperm.xlu0 %291, %v254
        %v293 = vpop.permute.xlu0 %292
        %296 = vset.pattern.permute.xlu0 0
        %297 = vperm.xlu0 %296, %v255
        %v298 = vpop.permute.xlu0 %297
        %301 = vset.pattern.permute.xlu0 0
        %302 = vperm.xlu0 %301, %v256
        %v303 = vpop.permute.xlu0 %302
        %v305 = vadd.f32 %v281, %v288
        %v306 = vadd.f32 %v282, %v293
        %v307 = vadd.f32 %v283, %v298
        %v308 = vadd.f32 %v284, %v303
        %309 = vst [vmem:[%s205] sm:$0xff] %v305
        %310 = vst [vmem:[%s205 + $0x8] sm:$0xff] %v306
        %311 = vst [vmem:[%s205 + $0x10] sm:$0xff] %v307
        %312 = vst [vmem:[%s205 + $0x18] sm:$0xff] %v308
        %s313 = sand.u32 %s112, 1
        %s314 = scalar_lea.sflag [#allocation4], %s313
        %s315 = sand.u32 %s112, 1
        %s316 = smul.addr %s315, 32
        %s317 = scalar_lea.vmem [#allocation5], %s316
        // Predicated region
        $region37: #{tpu_custom_call.1} parent=31 // pred_check
          %p318 = pneg %p122
        $region38: #{tpu_custom_call.1} parent=31 // pred_check_branch
          %320 = sbr.rel (%p318) target = $region40
        $region39: #{tpu_custom_call.1} parent=31 // pred_region
          %s322 = ssub.s32 512, 512
          %323 = vsyncadd %s314, %s322
          %s324 = smul.addr %s24, 16
          %s325 = sadd.s32 %s25, %s324
          %s326 = smul.addr %s325, 128
          %s327 = scalar_lea.hbm %s3, %s326
          %s328 = sshll.u32 %s317, 4
          %s329 = int_to_ptr.vmem [resolvable:$true] %s328
          %334 = dma.vmem_to_hbm [thread:$0]  %s329, 512, %s327, %s314, 128, 512, 8
        $region40: #{tpu_custom_call.1} parent=31 // pred_fallthru
          _
      $region32: #{tpu_custom_call.1} parent=5 // pred_fallthru
        _
      %p335 = scmp.le.s32.totalorder 2, %s15
      // Predicated region
      $region41: #{tpu_custom_call.1} parent=5 // pred_check
        %p336 = pneg %p335
      $region42: #{tpu_custom_call.1} parent=5 // pred_check_branch
        %338 = sbr.rel (%p336) target = $region44
      $region43: #{tpu_custom_call.1} parent=5 // pred_region
        %s339 = ssub.s32 %s15, 2
        // Predicated region
        $region45: #{tpu_custom_call.1} parent=43 // pred_check
          %p340 = pneg %p128
        $region46: #{tpu_custom_call.1} parent=43 // pred_check_branch
          %342 = sbr.rel (%p340) target = $region48
        $region47: #{tpu_custom_call.1} parent=43 // pred_region
          %s343 = sand.u32 %s113, 1
          %s344 = scalar_lea.sflag [#allocation4], %s343
          %s345 = sand.u32 %s113, 1
          %s346 = smul.addr %s345, 32
          %s347 = scalar_lea.vmem [#allocation5], %s346
          %348 = dma.done %s344, 512
        $region48: #{tpu_custom_call.1} parent=43 // pred_fallthru
          _
      $region44: #{tpu_custom_call.1} parent=5 // pred_fallthru
        _
    $region6: #{tpu_custom_call.1} parent=1 // loop_footer
      %s19 = sadd.s32 1, %s15
    $region7: #{tpu_custom_call.1} parent=1 // loop_footer_branch
      %14 = sbr.rel target = $region3
    $region8: #{tpu_custom_call.1} parent=1 // loop_exit
      _
    %349 = vsyncpa [#allocation3], 1
    %s350 = scalar_lea.sflag [#allocation3], 1
    %351 = vsyncpa %s350, 1
    %352 = vsyncpa [#allocation4], 1
    %s353 = scalar_lea.sflag [#allocation4], 1
    %354 = vsyncpa %s353, 1

</llo_original>
